<compile_context>
chip_gen: v6e
topology: v6e:2x2x1
jax: 0.10.0
libtpu: 0.0.40
codegen_flags: <defaults>
</compile_context>

<pallas_src>
import jax
import jax.numpy as jnp
from jax.experimental import pallas as pl
from jax.experimental.pallas import tpu as pltpu


def policy_kernel(x_ref, w1_ref, b1_ref, w2_ref, b2_ref, out_ref):
    # fc1: bf16 MXU matmul with f32 accumulation, then bias + ReLU in f32.
    h = jnp.dot(x_ref[...], w1_ref[...], preferred_element_type=jnp.float32)
    h = jnp.maximum(h + b1_ref[...], 0.0)                     # (TB, H) + (1, H)

    # fc2: keep the MXU on its bf16 path (cast activations), accumulate in f32.
    logits = jnp.dot(h.astype(jnp.bfloat16), w2_ref[...],
                     preferred_element_type=jnp.float32)
    logits = logits + b2_ref[...]                             # (TB, A) + (1, A)

    # softmax over the action axis, all f32 elementwise math.
    # Exact divide for the normalization: approx reciprocal's ~1e-3 relative
    # error breaks the "rows sum to 1" guarantee at tight tolerances.
    m = jnp.max(logits, axis=-1, keepdims=True)
    e = jnp.exp(logits - m)
    s = jnp.sum(e, axis=-1, keepdims=True)
    out_ref[...] = (e / s).astype(out_ref.dtype)


def policy_network_forward(state, w1, b1, w2, b2, *, block_b=512):
    """state: (B, state_dim) f32.  Returns (B, action_dim) f32 softmax probs."""
    B, S = state.shape
    H = w1.shape[1]
    A = w2.shape[1]

    # Pick a batch tile: whole batch if small, else block_b rows (multiple of 8 sublanes).
    if B <= block_b:
        tb, b_pad = B, B
    else:
        tb = block_b
        b_pad = pl.cdiv(B, tb) * tb

    x = state
    if b_pad != B:
        x = jnp.pad(x, ((0, b_pad - B), (0, 0)))  # zero rows -> finite softmax, sliced off below

    # bf16 matmul operands (halves HBM traffic for x, keeps MXU on its native path).
    x = x.astype(jnp.bfloat16)
    w1b = w1.astype(jnp.bfloat16)
    w2b = w2.astype(jnp.bfloat16)

    grid = (b_pad // tb,)
    out = pl.pallas_call(
        policy_kernel,
        out_shape=jax.ShapeDtypeStruct((b_pad, A), jnp.float32),
        grid_spec=pltpu.PrefetchScalarGridSpec(
            num_scalar_prefetch=0,
            grid=grid,
            in_specs=[
                pl.BlockSpec((tb, S), lambda i: (i, 0)),   # x: tiled over batch
                pl.BlockSpec((S, H), lambda i: (0, 0)),    # W1: grid-invariant (VMEM-resident)
                pl.BlockSpec((1, H), lambda i: (0, 0)),    # b1
                pl.BlockSpec((H, A), lambda i: (0, 0)),    # W2
                pl.BlockSpec((1, A), lambda i: (0, 0)),    # b2
            ],
            out_specs=pl.BlockSpec((tb, A), lambda i: (i, 0)),
        ),
        compiler_params=pltpu.CompilerParams(
            dimension_semantics=("parallel",),             # shards batch tiles across TCs on v7x
        ),
    )(x, w1b, b1, w2b, b2)

    return out[:B]


def init_params(key, state_dim, hidden_dim, action_dim):
    """Deterministic synthetic init (uniform, like torch Linear's default range)."""
    k1, k2, k3, k4 = jax.random.split(key, 4)
    bound1 = 1.0 / (state_dim ** 0.5)
    bound2 = 1.0 / (hidden_dim ** 0.5)
    w1 = jax.random.uniform(k1, (state_dim, hidden_dim), jnp.float32, -bound1, bound1)
    b1 = jax.random.uniform(k2, (1, hidden_dim), jnp.float32, -bound1, bound1)
    w2 = jax.random.uniform(k3, (hidden_dim, action_dim), jnp.float32, -bound2, bound2)
    b2 = jax.random.uniform(k4, (1, action_dim), jnp.float32, -bound2, bound2)
    return w1, b1, w2, b2


def _reference(state, w1, b1, w2, b2, *, bf16_matmul):
    """Pure-JAX reference.  bf16_matmul=True mirrors the kernel's MXU precision."""
    if bf16_matmul:
        xb = state.astype(jnp.bfloat16)
        h = jnp.dot(xb, w1.astype(jnp.bfloat16), preferred_element_type=jnp.float32)
        h = jnp.maximum(h + b1, 0.0)
        logits = jnp.dot(h.astype(jnp.bfloat16), w2.astype(jnp.bfloat16),
                         preferred_element_type=jnp.float32) + b2
    else:
        logits = jnp.maximum(state @ w1 + b1, 0.0) @ w2 + b2
    return jax.nn.softmax(logits, axis=1)


if __name__ == "__main__":
    # Small shapes consistent with the module: batch=8, state_dim=16, hidden=32, actions=4.
    B, STATE_DIM, HIDDEN_DIM, ACTION_DIM = 8, 16, 32, 4

    key = jax.random.PRNGKey(0)
    k_params, k_state, k_big = jax.random.split(key, 3)
    w1, b1, w2, b2 = init_params(k_params, STATE_DIM, HIDDEN_DIM, ACTION_DIM)
    state = jax.random.normal(k_state, (B, STATE_DIM), jnp.float32)

    probs = policy_network_forward(state, w1, b1, w2, b2)
    probs = jax.block_until_ready(probs)

    # sanity: shape, rows sum to ~1 (exact divide -> f32 rounding only), match references.
    assert probs.shape == (B, ACTION_DIM)
    assert jnp.allclose(jnp.sum(probs, axis=1), 1.0, atol=1e-5)
    ref_bf16 = _reference(state, w1, b1, w2, b2, bf16_matmul=True)
    ref_f32 = _reference(state, w1, b1, w2, b2, bf16_matmul=False)
    assert jnp.allclose(probs, ref_bf16, atol=1e-4), "mismatch vs bf16-matmul reference"
    assert jnp.allclose(probs, ref_f32, atol=2e-2), "mismatch vs f32 reference"

    # Exercise the tiled/padded multi-step grid path (2 full tiles + padding).
    B_BIG = 1100
    state_big = jax.random.normal(k_big, (B_BIG, STATE_DIM), jnp.float32)
    probs_big = jax.block_until_ready(
        policy_network_forward(state_big, w1, b1, w2, b2, block_b=512))
    assert probs_big.shape == (B_BIG, ACTION_DIM)
    assert jnp.allclose(jnp.sum(probs_big, axis=1), 1.0, atol=1e-5)
    assert jnp.allclose(
        probs_big, _reference(state_big, w1, b1, w2, b2, bf16_matmul=True), atol=1e-4)

    print("KERNEL_OK")
</pallas_src>

<mosaic_0001>
module attributes {stable_mosaic.version = 11 : i64} {
  func.func @policy_kernel(%arg0: i32, %arg1: memref<8x16xbf16, #tpu.memory_space<vmem>>, %arg2: memref<16x32xbf16, #tpu.memory_space<vmem>>, %arg3: memref<1x32xf32, #tpu.memory_space<vmem>>, %arg4: memref<32x4xbf16, #tpu.memory_space<vmem>>, %arg5: memref<1x4xf32, #tpu.memory_space<vmem>>, %arg6: memref<8x4xf32, #tpu.memory_space<vmem>>) attributes {dimension_semantics = [#tpu.dimension_semantics<parallel>], iteration_bounds = array<i64: 1>, scalar_prefetch = 0 : i64, scratch_operands = 0 : i64, tpu.core_type = #tpu.core_type<tc>, window_params = [{transform_indices = @transform_0, window_bounds = array<i64: 8, 16>}, {pipeline_mode = #tpu.pipeline_mode<synchronous>, transform_indices = @transform_1, window_bounds = array<i64: 16, 32>}, {pipeline_mode = #tpu.pipeline_mode<synchronous>, transform_indices = @transform_2, window_bounds = array<i64: 1, 32>}, {pipeline_mode = #tpu.pipeline_mode<synchronous>, transform_indices = @transform_3, window_bounds = array<i64: 32, 4>}, {pipeline_mode = #tpu.pipeline_mode<synchronous>, transform_indices = @transform_4, window_bounds = array<i64: 1, 4>}, {transform_indices = @transform_5, window_bounds = array<i64: 8, 4>}]} {
    %c0 = arith.constant 0 : index
    %c0_0 = arith.constant 0 : index
    %0 = vector.load %arg1[%c0, %c0_0] : memref<8x16xbf16, #tpu.memory_space<vmem>>, vector<8x16xbf16>
    %c0_1 = arith.constant 0 : index
    %c0_2 = arith.constant 0 : index
    %1 = vector.load %arg2[%c0_1, %c0_2] : memref<16x32xbf16, #tpu.memory_space<vmem>>, vector<16x32xbf16>
    %cst = arith.constant dense<0.000000e+00> : vector<8x32xf32>
    %2 = tpu.matmul %0, %1, %cst {dimension_numbers = #tpu.dot_dimension_numbers<[1], [0], [0], [1], [0, 0, 1, 1], [], []>} : vector<8x16xbf16>, vector<16x32xbf16>, vector<8x32xf32> -> vector<8x32xf32>
    %c0_3 = arith.constant 0 : index
    %c0_4 = arith.constant 0 : index
    %3 = vector.load %arg3[%c0_3, %c0_4] : memref<1x32xf32, #tpu.memory_space<vmem>>, vector<1x32xf32>
    %4 = vector.broadcast %3 : vector<1x32xf32> to vector<8x32xf32>
    %5 = arith.addf %2, %4 : vector<8x32xf32>
    %cst_5 = arith.constant 0.000000e+00 : f32
    %6 = vector.broadcast %cst_5 : f32 to vector<8x32xf32>
    %7 = arith.maximumf %5, %6 : vector<8x32xf32>
    %8 = arith.truncf %7 : vector<8x32xf32> to vector<8x32xbf16>
    %c0_6 = arith.constant 0 : index
    %c0_7 = arith.constant 0 : index
    %9 = vector.load %arg4[%c0_6, %c0_7] : memref<32x4xbf16, #tpu.memory_space<vmem>>, vector<32x4xbf16>
    %cst_8 = arith.constant dense<0.000000e+00> : vector<8x4xf32>
    %10 = tpu.matmul %8, %9, %cst_8 {dimension_numbers = #tpu.dot_dimension_numbers<[1], [0], [0], [1], [0, 0, 1, 1], [], []>} : vector<8x32xbf16>, vector<32x4xbf16>, vector<8x4xf32> -> vector<8x4xf32>
    %c0_9 = arith.constant 0 : index
    %c0_10 = arith.constant 0 : index
    %11 = vector.load %arg5[%c0_9, %c0_10] : memref<1x4xf32, #tpu.memory_space<vmem>>, vector<1x4xf32>
    %12 = vector.broadcast %11 : vector<1x4xf32> to vector<8x4xf32>
    %13 = arith.addf %10, %12 : vector<8x4xf32>
    %cst_11 = arith.constant dense<0xFF800000> : vector<8xf32>
    %14 = vector.multi_reduction <maximumf>, %13, %cst_11 [1] : vector<8x4xf32> to vector<8xf32>
    %15 = vector.shape_cast %14 : vector<8xf32> to vector<8x1xf32>
    %16 = vector.broadcast %15 : vector<8x1xf32> to vector<8x4xf32>
    %17 = arith.subf %13, %16 : vector<8x4xf32>
    %18 = math.exp %17 : vector<8x4xf32>
    %cst_12 = arith.constant dense<0.000000e+00> : vector<8xf32>
    %19 = vector.multi_reduction <add>, %18, %cst_12 [1] : vector<8x4xf32> to vector<8xf32>
    %20 = vector.shape_cast %19 : vector<8xf32> to vector<8x1xf32>
    %21 = vector.broadcast %20 : vector<8x1xf32> to vector<8x4xf32>
    %22 = arith.divf %18, %21 : vector<8x4xf32>
    %c0_13 = arith.constant 0 : index
    %c0_14 = arith.constant 0 : index
    %23 = vector.load %arg6[%c0_13, %c0_14] : memref<8x4xf32, #tpu.memory_space<vmem>>, vector<8x4xf32>
    tpu.vector_store %arg6[%c0_13, %c0_14], %22 {strides = array<i32>} : memref<8x4xf32, #tpu.memory_space<vmem>>, vector<8x4xf32>,
    return
  }
  func.func @transform_0(%arg0: i32) -> (i32, i32) {
    %c0_i32 = arith.constant 0 : i32
    %c0_i32_0 = arith.constant 0 : i32
    return %arg0, %c0_i32 : i32, i32
  }
  func.func @transform_1(%arg0: i32) -> (i32, i32) {
    %c0_i32 = arith.constant 0 : i32
    %c0_i32_0 = arith.constant 0 : i32
    %c0_i32_1 = arith.constant 0 : i32
    return %c0_i32, %c0_i32_0 : i32, i32
  }
  func.func @transform_2(%arg0: i32) -> (i32, i32) {
    %c0_i32 = arith.constant 0 : i32
    %c0_i32_0 = arith.constant 0 : i32
    %c0_i32_1 = arith.constant 0 : i32
    return %c0_i32, %c0_i32_0 : i32, i32
  }
  func.func @transform_3(%arg0: i32) -> (i32, i32) {
    %c0_i32 = arith.constant 0 : i32
    %c0_i32_0 = arith.constant 0 : i32
    %c0_i32_1 = arith.constant 0 : i32
    return %c0_i32, %c0_i32_0 : i32, i32
  }
  func.func @transform_4(%arg0: i32) -> (i32, i32) {
    %c0_i32 = arith.constant 0 : i32
    %c0_i32_0 = arith.constant 0 : i32
    %c0_i32_1 = arith.constant 0 : i32
    return %c0_i32, %c0_i32_0 : i32, i32
  }
  func.func @transform_5(%arg0: i32) -> (i32, i32) {
    %c0_i32 = arith.constant 0 : i32
    %c0_i32_0 = arith.constant 0 : i32
    return %arg0, %c0_i32 : i32, i32
  }
}

</mosaic_0001>

<llo_original>
// kernel: tpu_custom_call.1
$region0: #{tpu_custom_call.1}
  #allocation0 [shape = 'u32[]', space=smem, size = 0x4, offset = 0x4, fixed_abs, tag = 'smem constant byte address 0x4 - core index']
  #allocation1 [shape = 'u32[144,128]{1,0:T(1,128)}', space=vmem, size = 0x12000, scoped, tag = 'internal scratch']
  %s0 = inlined_call_operand.vmem [shape: bf16[8,16], index: 0, kind: input, shape index: {}]
  %s1 = inlined_call_operand.vmem [shape: bf16[16,32], index: 1, kind: input, shape index: {}]
  %s2 = inlined_call_operand.vmem [shape: f32[1,32], index: 2, kind: input, shape index: {}]
  %s3 = inlined_call_operand.vmem [shape: bf16[32,4], index: 3, kind: input, shape index: {}]
  %s4 = inlined_call_operand.vmem [shape: f32[1,4], index: 4, kind: input, shape index: {}]
  %s5 = inlined_call_operand.vmem [shape: f32[8,4], index: 5, kind: output, shape index: {}]
  %s6 = sld [smem:[#allocation0]]
  $region30: #{tpu_custom_call.1} parent=0
    _
  %s8 = ssub.s32 1, %s6
  %s9 = scalar_select 0, %s8, %s6
  // Predicated region
  $region2: #{tpu_custom_call.1} parent=0 // pred_check
    _
  $region3: #{tpu_custom_call.1} parent=0 // pred_check_branch
    %11 = sbr.rel (0) target = $region5
  $region4: #{tpu_custom_call.1} parent=0 // pred_region
    _
  $region5: #{tpu_custom_call.1} parent=0 // pred_fallthru
    _
  // Predicated region
  $region6: #{tpu_custom_call.1} parent=0 // pred_check
    _
  $region7: #{tpu_custom_call.1} parent=0 // pred_check_branch
    %13 = sbr.rel (0) target = $region9
  $region8: #{tpu_custom_call.1} parent=0 // pred_region
    _
  $region9: #{tpu_custom_call.1} parent=0 // pred_fallthru
    _
  // Predicated region
  $region10: #{tpu_custom_call.1} parent=0 // pred_check
    _
  $region11: #{tpu_custom_call.1} parent=0 // pred_check_branch
    %15 = sbr.rel (0) target = $region13
  $region12: #{tpu_custom_call.1} parent=0 // pred_region
    _
  $region13: #{tpu_custom_call.1} parent=0 // pred_fallthru
    _
  // Predicated region
  $region14: #{tpu_custom_call.1} parent=0 // pred_check
    _
  $region15: #{tpu_custom_call.1} parent=0 // pred_check_branch
    %17 = sbr.rel (0) target = $region17
  $region16: #{tpu_custom_call.1} parent=0 // pred_region
    _
  $region17: #{tpu_custom_call.1} parent=0 // pred_fallthru
    _
  // Predicated region
  $region18: #{tpu_custom_call.1} parent=0 // pred_check
    _
  $region19: #{tpu_custom_call.1} parent=0 // pred_check_branch
    %19 = sbr.rel (0) target = $region21
  $region20: #{tpu_custom_call.1} parent=0 // pred_region
    _
  $region21: #{tpu_custom_call.1} parent=0 // pred_fallthru
    _
  %v21 = vld [vmem:[%s0] sm:$0xf]
  %v22 = vld [vmem:[%s1] sm:$0xf]
  %v23 = vld [vmem:[%s1 + $0x4] sm:$0xf]
  %v24 = vld [vmem:[%s2] sm:$0x1]
  %v26 = vlaneseq
  %v27 = vshrl.u32 %v26, 7
  %v28 = vsub.s32 0, %v27
  %v29 = vrot.slane %v24, %v28
  %v33 = vunpack.c.l.b16 %v22
  %v34 = vunpack.c.l.b16 %v23
  %v35 = vpack.c.b16 %v34, %v33
  %vm37 = vcmask 130048
  %v39 = vsel %vm37, %v21, 0
  %41 = vmatprep.subr.bf16.mxu0 0
  %42 = vmatpush1.bf16.msra.mxu0 0
  %43 = vmatprep.subr.bf16.mxu0 0
  %44 = vmatpush1.bf16.msra.mxu0 0
  %45 = vmatprep.subr.bf16.mxu0 0
  %46 = vmatpush1.bf16.msra.mxu0 0
  %47 = vmatprep.subr.bf16.mxu0 0
  %48 = vmatpush1.bf16.msra.mxu0 0
  %49 = vmatprep.subr.bf16.mxu0 0
  %50 = vmatpush1.bf16.msra.mxu0 0
  %51 = vmatprep.subr.bf16.mxu0 0
  %52 = vmatpush1.bf16.msra.mxu0 0
  %53 = vmatprep.subr.bf16.mxu0 0
  %54 = vmatpush1.bf16.msra.mxu0 0
  %55 = vmatprep.subr.bf16.mxu0 0
  %56 = vmatpush1.bf16.msra.mxu0 %v35
  %57 = vmatprep.subr.bf16.mxu0 0
  %58 = vmatpush2.bf16.msra.mxu0 0
  %59 = vmatprep.subr.bf16.mxu0 0
  %60 = vmatpush2.bf16.msra.mxu0 0
  %61 = vmatprep.subr.bf16.mxu0 0
  %62 = vmatpush2.bf16.msra.mxu0 0
  %63 = vmatprep.subr.bf16.mxu0 0
  %64 = vmatpush2.bf16.msra.mxu0 0
  %65 = vmatprep.subr.bf16.mxu0 0
  %66 = vmatpush2.bf16.msra.mxu0 0
  %67 = vmatprep.subr.bf16.mxu0 0
  %68 = vmatpush2.bf16.msra.mxu0 0
  %69 = vmatprep.subr.bf16.mxu0 0
  %70 = vmatpush2.bf16.msra.mxu0 0
  %71 = vmatprep.subr.bf16.mxu0 0
  %72 = vmatpush2.bf16.msra.mxu0 0
  %73 = vmatprep.mubr.bf16.mxu0 0
  %74 = vmatmul.mubr.bf16.gmra.mxu0 %v39
  %v75 = vpop.f32.mrf.mxu0
  %v76 = vadd.f32 %v29, %v75
  %v77 = vpop.f32.mrf.mxu0
  %v78 = vpop.f32.mrf.mxu0
  %v79 = vpop.f32.mrf.mxu0
  %80 = vdwg.mxu0
  %v81 = vmax.f32 %v76, 0.0
  %v82 = vpack.c.bf16 %v81, %v81
  %v83 = vld [vmem:[%s3] sm:$0xf]
  %v84 = vld [vmem:[%s3 + $0x4] sm:$0xf]
  %v85 = vld [vmem:[%s3 + $0x8] sm:$0xf]
  %v86 = vld [vmem:[%s3 + $0xc] sm:$0xf]
  %v87 = vld [vmem:[%s4] sm:$0x1]
  %v89 = vlaneseq
  %v90 = vshrl.u32 %v89, 7
  %v91 = vsub.s32 0, %v90
  %v92 = vrot.slane %v87, %v91
  %v98 = vunpack.c.l.b16 %v83
  %v99 = vunpack.c.l.b16 %v84
  %v100 = vunpack.c.l.b16 %v85
  %v101 = vunpack.c.l.b16 %v86
  %v102 = vpack.c.b16 %v99, %v98
  %v103 = vpack.c.b16 %v101, %v100
  %vm106 = vcmask 261120
  %v108 = vsel %vm106, %v82, 0
  %110 = vmatprep.subr.bf16.mxu0 0
  %111 = vmatpush1.bf16.msra.mxu0 0
  %112 = vmatprep.subr.bf16.mxu0 0
  %113 = vmatpush1.bf16.msra.mxu0 0
  %114 = vmatprep.subr.bf16.mxu0 0
  %115 = vmatpush1.bf16.msra.mxu0 0
  %116 = vmatprep.subr.bf16.mxu0 0
  %117 = vmatpush1.bf16.msra.mxu0 0
  %118 = vmatprep.subr.bf16.mxu0 0
  %119 = vmatpush1.bf16.msra.mxu0 0
  %120 = vmatprep.subr.bf16.mxu0 0
  %121 = vmatpush1.bf16.msra.mxu0 0
  %122 = vmatprep.subr.bf16.mxu0 0
  %123 = vmatpush1.bf16.msra.mxu0 %v103
  %124 = vmatprep.subr.bf16.mxu0 0
  %125 = vmatpush1.bf16.msra.mxu0 %v102
  %126 = vmatprep.subr.bf16.mxu0 0
  %127 = vmatpush2.bf16.msra.mxu0 0
  %128 = vmatprep.subr.bf16.mxu0 0
  %129 = vmatpush2.bf16.msra.mxu0 0
  %130 = vmatprep.subr.bf16.mxu0 0
  %131 = vmatpush2.bf16.msra.mxu0 0
  %132 = vmatprep.subr.bf16.mxu0 0
  %133 = vmatpush2.bf16.msra.mxu0 0
  %134 = vmatprep.subr.bf16.mxu0 0
  %135 = vmatpush2.bf16.msra.mxu0 0
  %136 = vmatprep.subr.bf16.mxu0 0
  %137 = vmatpush2.bf16.msra.mxu0 0
  %138 = vmatprep.subr.bf16.mxu0 0
  %139 = vmatpush2.bf16.msra.mxu0 0
  %140 = vmatprep.subr.bf16.mxu0 0
  %141 = vmatpush2.bf16.msra.mxu0 0
  %142 = vmatprep.mubr.bf16.mxu0 0
  %143 = vmatmul.mubr.bf16.gmra.mxu0 %v108
  %v144 = vpop.f32.mrf.mxu0
  %v145 = vadd.f32 %v92, %v144
  %v146 = vpop.f32.mrf.mxu0
  %v147 = vpop.f32.mrf.mxu0
  %v148 = vpop.f32.mrf.mxu0
  %149 = vdwg.mxu0
  %vm150 = vcmask 31744
  %v151 = vsel %vm150, %v145, -inf
  %152 = vmax.xlane.f32.xlu0 %v151
  %v153 = vpop.xlane.xlu0 %152
  %v154 = vsub.f32 %v145, %v153
  %v155 = vmul.f32 %v154, 1.442695
  %v156 = vpow.pop %v155
  %v157 = vsel %vm150, %v156, 0.0
  %158 = vadd.xlane.f32.xlu0 %v157
  %v159 = vpop.xlane.xlu0 %158
  %v160 = vrcp.pop %v159
  %v161 = vmul.f32 %v156, %v160
  %162 = vst.msk [vmem:[%s5] sm:$0xff] %vm150, %v161
  // Predicated region
  $region22: #{tpu_custom_call.1} parent=0 // pred_check
    _
  $region23: #{tpu_custom_call.1} parent=0 // pred_check_branch
    %164 = sbr.rel (0) target = $region25
  $region24: #{tpu_custom_call.1} parent=0 // pred_region
    _
  $region25: #{tpu_custom_call.1} parent=0 // pred_fallthru
    _
  // Predicated region
  $region26: #{tpu_custom_call.1} parent=0 // pred_check
    _
  $region27: #{tpu_custom_call.1} parent=0 // pred_check_branch
    %166 = sbr.rel (0) target = $region29
  $region28: #{tpu_custom_call.1} parent=0 // pred_region
    _
  $region29: #{tpu_custom_call.1} parent=0 // pred_fallthru
    _

</llo_original>
